<compile_context>
chip_gen: v6e
topology: v6e:2x2x1
jax: 0.10.0
libtpu: 0.0.40
codegen_flags: <defaults>
</compile_context>

<pallas_src>
import functools
from typing import NamedTuple, Optional

import jax
import jax.numpy as jnp
from jax.experimental import pallas as pl
from jax.experimental.pallas import tpu as pltpu


def _round_up(x: int, m: int) -> int:
    return ((x + m - 1) // m) * m


# --------------------------------------------------------------------------
# Kernel
# --------------------------------------------------------------------------
def _llama_mlp_kernel(x_ref, res_ref, wgu_ref, wd_ref, out_ref, acc_ref, *, ti):
    """One (token-tile i, intermediate-tile k) grid step.

    x_ref   : (tm, H)      hidden_states tile (compute dtype)
    res_ref : (tm, H)      residual tile
    wgu_ref : (H, 2*ti)    fused [gate | up] weight slab for this I tile
    wd_ref  : (ti, H)      down_proj weight slice (transposed)
    out_ref : (tm, H)
    acc_ref : (tm, H) f32  accumulator, resident across the I (k) axis
    """
    k = pl.program_id(1)

    # Fold the residual in exactly once per token tile.
    @pl.when(k == 0)
    def _():
        acc_ref[...] = res_ref[...].astype(jnp.float32)

    x = x_ref[...]
    # Single MXU push for gate and up; static lane-aligned slices afterwards.
    gu = jnp.dot(x, wgu_ref[...], preferred_element_type=jnp.float32)  # (tm, 2*ti)
    gate = gu[:, :ti]
    up = gu[:, ti:]

    # SiLU(gate) * up in f32 (VPU + EUP).
    act = gate * jax.nn.sigmoid(gate) * up

    # Partial down-projection for this I slice, accumulated in f32.
    acc_ref[...] += jnp.dot(act.astype(wd_ref.dtype), wd_ref[...],
                            preferred_element_type=jnp.float32)

    @pl.when(k == pl.num_programs(1) - 1)
    def _():
        out_ref[...] = acc_ref[...].astype(out_ref.dtype)


# --------------------------------------------------------------------------
# One-time weight preparation (model-load time, not per forward)
# --------------------------------------------------------------------------
class PreparedWeights(NamedTuple):
    wgu: jax.Array     # (H, 2*I_pad): per-tile [gate(ti) | up(ti)] interleave
    wd: jax.Array      # (I_pad, H)   transposed down_proj, I zero-padded
    ti: int            # intermediate tile baked into the wgu layout
    hidden: int        # H
    inter: int         # original (unpadded) intermediate size I


def prepare_mlp_weights(w_gate, w_up, w_down, *, dtype=None, ti=512) -> PreparedWeights:
    """Transpose, cast, pad I to a multiple of ti, and fuse gate+up per tile.

    nn.Linear weights are (out_features, in_features):
      w_gate, w_up : (I, H)        w_down : (H, I)
    Zero-padded I columns are mathematically exact (silu(0)*0 == 0, no biases).
    On v7x prefer ti=256 for VMEM headroom (64 MiB/TC); v5e/v6e can use 512-1024.
    """
    w_gate = jnp.asarray(w_gate)
    w_up = jnp.asarray(w_up)
    w_down = jnp.asarray(w_down)
    if dtype is not None:
        w_gate = w_gate.astype(dtype)
        w_up = w_up.astype(dtype)
        w_down = w_down.astype(dtype)

    I, H = w_gate.shape
    assert w_up.shape == (I, H) and w_down.shape == (H, I)

    ti = max(128, (int(ti) // 128) * 128)
    ti = min(ti, _round_up(I, 128))          # don't over-pad tiny I
    I_pad = _round_up(I, ti)                 # ti always divides I_pad exactly
    n = I_pad // ti

    wg_t = jnp.pad(w_gate.T, ((0, 0), (0, I_pad - I)))    # (H, I_pad)
    wu_t = jnp.pad(w_up.T, ((0, 0), (0, I_pad - I)))      # (H, I_pad)
    # Per-tile interleave: columns [k*2ti, k*2ti+ti) = gate tile k,
    #                      columns [k*2ti+ti, (k+1)*2ti) = up tile k.
    wgu = jnp.concatenate(
        [wg_t.reshape(H, n, ti), wu_t.reshape(H, n, ti)], axis=2
    ).reshape(H, 2 * I_pad)
    wd_t = jnp.pad(w_down.T, ((0, I_pad - I), (0, 0)))    # (I_pad, H)

    return PreparedWeights(wgu=wgu, wd=wd_t, ti=ti, hidden=H, inter=I)


# --------------------------------------------------------------------------
# Chip-aware tile plan
# --------------------------------------------------------------------------
def _tile_plan():
    kind = ""
    try:
        kind = jax.devices()[0].device_kind.lower()
    except Exception:
        pass
    if "v5 lite" in kind or "v5e" in kind or "v5lite" in kind:
        # v5e: crossover ~240 FLOP/byte -> tm=256 is compute-bound; 128 MiB VMEM.
        return dict(tm_max=256, vmem_limit_bytes=80 << 20, prefer_two_m_tiles=False)
    if "v6" in kind:
        # v6e: crossover ~650 FLOP/byte -> need large tm; 128 MiB VMEM.
        return dict(tm_max=1024, vmem_limit_bytes=104 << 20, prefer_two_m_tiles=False)
    if "v7" in kind:
        # v7x: only 64 MiB physical VMEM per TC; keep both TCs busy on M axis.
        return dict(tm_max=512, vmem_limit_bytes=56 << 20, prefer_two_m_tiles=True)
    # Unknown chip: conservative tiles, compiler-default VMEM limit.
    return dict(tm_max=256, vmem_limit_bytes=None, prefer_two_m_tiles=False)


# --------------------------------------------------------------------------
# Fused forward
# --------------------------------------------------------------------------
def ipex_llama_mlp(hidden_states, residual, weights: PreparedWeights, *,
                   tm_max: Optional[int] = None,
                   vmem_limit_bytes: Optional[int] = None,
                   compute_dtype=None):
    """Fused Llama MLP forward: silu(x@Wg^T) * (x@Wu^T) @ Wd^T + residual.

    hidden_states, residual : (B, S, H)
    weights                 : output of prepare_mlp_weights()

    NOTE: activations are cast to the weight dtype before the MXU matmuls
    (bf16 weights => bf16 matmul inputs); accumulation is always f32.  Pass
    compute_dtype=jnp.float32 to keep f32 matmul inputs.
    """
    B, S, H = hidden_states.shape
    assert residual.shape == (B, S, H)
    ti = weights.ti
    I_pad, Hw = weights.wd.shape
    assert Hw == H and weights.wgu.shape == (H, 2 * I_pad) and I_pad % ti == 0

    plan = _tile_plan()
    if tm_max is None:
        tm_max = plan["tm_max"]
    if vmem_limit_bytes is None:
        vmem_limit_bytes = plan["vmem_limit_bytes"]

    M = B * S
    if compute_dtype is None:
        compute_dtype = weights.wgu.dtype
    # Sublane pack of the compute dtype: 8 (f32), 16 (bf16), 32 (int8/fp8).
    pack = max(8, 32 // jnp.dtype(compute_dtype).itemsize)

    # --- token-tile sizing -------------------------------------------------
    tm_max = max(pack, (int(tm_max) // pack) * pack)
    tm = min(tm_max, _round_up(M, pack))
    if plan["prefer_two_m_tiles"] and tm >= M and M >= 2 * pack:
        # v7x megacore: make sure the parallel M axis has >= 2 tiles so both
        # TensorCores get work.
        tm = _round_up((M + 1) // 2, pack)
    M_pad = _round_up(M, tm)

    # --- cheap per-call operand prep ---------------------------------------
    x2d = hidden_states.reshape(M, H).astype(compute_dtype)
    r2d = residual.reshape(M, H)
    if M_pad != M:
        x2d = jnp.pad(x2d, ((0, M_pad - M), (0, 0)))
        r2d = jnp.pad(r2d, ((0, M_pad - M), (0, 0)))

    grid = (M_pad // tm, I_pad // ti)

    kernel = functools.partial(_llama_mlp_kernel, ti=ti)

    cp_kwargs = dict(dimension_semantics=("parallel", "arbitrary"))
    if vmem_limit_bytes is not None:
        cp_kwargs["vmem_limit_bytes"] = int(vmem_limit_bytes)

    out2d = pl.pallas_call(
        kernel,
        out_shape=jax.ShapeDtypeStruct((M_pad, H), hidden_states.dtype),
        grid_spec=pltpu.PrefetchScalarGridSpec(
            num_scalar_prefetch=0,
            grid=grid,
            in_specs=[
                pl.BlockSpec((tm, H), lambda i, k: (i, 0)),       # hidden tile
                pl.BlockSpec((tm, H), lambda i, k: (i, 0)),       # residual tile
                pl.BlockSpec((H, 2 * ti), lambda i, k: (0, k)),   # fused gate|up slab
                pl.BlockSpec((ti, H), lambda i, k: (k, 0)),       # down W slice
            ],
            out_specs=pl.BlockSpec((tm, H), lambda i, k: (i, 0)),
            scratch_shapes=[pltpu.VMEM((tm, H), jnp.float32)],
        ),
        compiler_params=pltpu.CompilerParams(**cp_kwargs),
    )(x2d, r2d, weights.wgu, weights.wd)

    return out2d[:M].reshape(B, S, H)


# --------------------------------------------------------------------------
# Pure-JAX reference
# --------------------------------------------------------------------------
def _reference(hidden_states, residual, w_gate, w_up, w_down):
    gate = jnp.einsum("bsh,ih->bsi", hidden_states, w_gate)
    up = jnp.einsum("bsh,ih->bsi", hidden_states, w_up)
    act = gate * jax.nn.sigmoid(gate) * up
    down = jnp.einsum("bsi,hi->bsh", act, w_down)
    return down + residual


if __name__ == "__main__":
    key = jax.random.PRNGKey(0)

    # ---------------- Test 1: f32, tile-friendly shapes --------------------
    B, S, H, I = 2, 8, 128, 256
    k1, k2, k3, k4, k5, k6 = jax.random.split(key, 6)
    hidden_states = jax.random.normal(k1, (B, S, H), dtype=jnp.float32)
    residual = jax.random.normal(k2, (B, S, H), dtype=jnp.float32)
    w_gate = jax.random.normal(k3, (I, H), dtype=jnp.float32) * 0.02
    w_up = jax.random.normal(k4, (I, H), dtype=jnp.float32) * 0.02
    w_down = jax.random.normal(k5, (H, I), dtype=jnp.float32) * 0.02

    # ti=128 forces 2 I-tiles so the accumulator / residual-once path runs.
    weights = prepare_mlp_weights(w_gate, w_up, w_down, ti=128)
    out = ipex_llama_mlp(hidden_states, residual, weights)
    out = jax.block_until_ready(out)

    ref = _reference(hidden_states, residual, w_gate, w_up, w_down)
    assert out.shape == (B, S, H)
    assert jnp.allclose(out, ref, atol=1e-4, rtol=1e-4), "f32 mismatch vs reference"

    # ------- Test 2: bf16 weights/activations, ragged M, padded I ----------
    B2, S2, H2, I2 = 1, 7, 256, 320          # M=7 (padded to sublane pack), I=320 -> I_pad=384
    j1, j2, j3, j4, j5 = jax.random.split(k6, 5)
    hs2_f32 = jax.random.normal(j1, (B2, S2, H2), dtype=jnp.float32)
    res2_f32 = jax.random.normal(j2, (B2, S2, H2), dtype=jnp.float32)
    wg2 = jax.random.normal(j3, (I2, H2), dtype=jnp.float32) * 0.02
    wu2 = jax.random.normal(j4, (I2, H2), dtype=jnp.float32) * 0.02
    wd2 = jax.random.normal(j5, (H2, I2), dtype=jnp.float32) * 0.02

    weights2 = prepare_mlp_weights(wg2, wu2, wd2, dtype=jnp.bfloat16, ti=128)
    out2 = ipex_llama_mlp(hs2_f32.astype(jnp.bfloat16),
                          res2_f32.astype(jnp.bfloat16),
                          weights2)
    out2 = jax.block_until_ready(out2)

    ref2 = _reference(hs2_f32, res2_f32, wg2, wu2, wd2)
    assert out2.shape == (B2, S2, H2)
    assert jnp.allclose(out2.astype(jnp.float32), ref2, atol=5e-2, rtol=5e-2), \
        "bf16 mismatch vs f32 reference"

    print("KERNEL_OK")
</pallas_src>

<mosaic_0001>
module attributes {stable_mosaic.version = 11 : i64} {
  func.func @_llama_mlp_kernel(%arg0: i32, %arg1: i32, %arg2: memref<16x128xf32, #tpu.memory_space<vmem>>, %arg3: memref<16x128xf32, #tpu.memory_space<vmem>>, %arg4: memref<128x256xf32, #tpu.memory_space<vmem>>, %arg5: memref<128x128xf32, #tpu.memory_space<vmem>>, %arg6: memref<16x128xf32, #tpu.memory_space<vmem>>, %arg7: memref<16x128xf32, #tpu.memory_space<vmem>>) attributes {dimension_semantics = [#tpu.dimension_semantics<parallel>, #tpu.dimension_semantics<arbitrary>], iteration_bounds = array<i64: 1, 2>, scalar_prefetch = 0 : i64, scratch_operands = 1 : i64, tpu.core_type = #tpu.core_type<tc>, window_params = [{transform_indices = @transform_0, window_bounds = array<i64: 16, 128>}, {transform_indices = @transform_1, window_bounds = array<i64: 16, 128>}, {transform_indices = @transform_2, window_bounds = array<i64: 128, 256>}, {transform_indices = @transform_3, window_bounds = array<i64: 128, 128>}, {transform_indices = @transform_4, window_bounds = array<i64: 16, 128>}]} {
    %c0_i32 = arith.constant 0 : i32
    %0 = arith.cmpi eq, %arg1, %c0_i32 : i32
    %1 = arith.extui %0 : i1 to i32
    %c0_i32_0 = arith.constant 0 : i32
    %2 = arith.cmpi ne, %1, %c0_i32_0 : i32
    scf.if %2 {
      %c0_13 = arith.constant 0 : index
      %c0_14 = arith.constant 0 : index
      %23 = vector.load %arg3[%c0_13, %c0_14] : memref<16x128xf32, #tpu.memory_space<vmem>>, vector<16x128xf32>
      %c0_15 = arith.constant 0 : index
      %c0_16 = arith.constant 0 : index
      %24 = vector.load %arg7[%c0_15, %c0_16] : memref<16x128xf32, #tpu.memory_space<vmem>>, vector<16x128xf32>
      tpu.vector_store %arg7[%c0_15, %c0_16], %23 {strides = array<i32>} : memref<16x128xf32, #tpu.memory_space<vmem>>, vector<16x128xf32>,
    } else {
    }
    %c0 = arith.constant 0 : index
    %c0_1 = arith.constant 0 : index
    %3 = vector.load %arg2[%c0, %c0_1] : memref<16x128xf32, #tpu.memory_space<vmem>>, vector<16x128xf32>
    %c0_2 = arith.constant 0 : index
    %c0_3 = arith.constant 0 : index
    %4 = vector.load %arg4[%c0_2, %c0_3] : memref<128x256xf32, #tpu.memory_space<vmem>>, vector<128x256xf32>
    %cst = arith.constant dense<0.000000e+00> : vector<16x256xf32>
    %5 = tpu.matmul %3, %4, %cst {dimension_numbers = #tpu.dot_dimension_numbers<[1], [0], [0], [1], [0, 0, 1, 1], [], []>} : vector<16x128xf32>, vector<128x256xf32>, vector<16x256xf32> -> vector<16x256xf32>
    %6 = vector.extract_strided_slice %5 {offsets = [0, 0], sizes = [16, 128], strides = [1, 1]} : vector<16x256xf32> to vector<16x128xf32>
    %7 = vector.extract_strided_slice %5 {offsets = [0, 128], sizes = [16, 128], strides = [1, 1]} : vector<16x256xf32> to vector<16x128xf32>
    %8 = arith.negf %6 : vector<16x128xf32>
    %9 = math.exp %8 : vector<16x128xf32>
    %cst_4 = arith.constant 1.000000e+00 : f32
    %10 = vector.broadcast %cst_4 : f32 to vector<16x128xf32>
    %11 = arith.addf %10, %9 : vector<16x128xf32>
    %12 = arith.divf %10, %11 : vector<16x128xf32>
    %13 = arith.mulf %6, %12 : vector<16x128xf32>
    %14 = arith.mulf %13, %7 : vector<16x128xf32>
    %c0_5 = arith.constant 0 : index
    %c0_6 = arith.constant 0 : index
    %15 = vector.load %arg7[%c0_5, %c0_6] : memref<16x128xf32, #tpu.memory_space<vmem>>, vector<16x128xf32>
    %c0_7 = arith.constant 0 : index
    %c0_8 = arith.constant 0 : index
    %16 = vector.load %arg5[%c0_7, %c0_8] : memref<128x128xf32, #tpu.memory_space<vmem>>, vector<128x128xf32>
    %cst_9 = arith.constant dense<0.000000e+00> : vector<16x128xf32>
    %17 = tpu.matmul %14, %16, %cst_9 {dimension_numbers = #tpu.dot_dimension_numbers<[1], [0], [0], [1], [0, 0, 1, 1], [], []>} : vector<16x128xf32>, vector<128x128xf32>, vector<16x128xf32> -> vector<16x128xf32>
    %18 = arith.addf %15, %17 : vector<16x128xf32>
    %c0_10 = arith.constant 0 : index
    %c0_11 = arith.constant 0 : index
    %19 = vector.load %arg7[%c0_10, %c0_11] : memref<16x128xf32, #tpu.memory_space<vmem>>, vector<16x128xf32>
    tpu.vector_store %arg7[%c0_10, %c0_11], %18 {strides = array<i32>} : memref<16x128xf32, #tpu.memory_space<vmem>>, vector<16x128xf32>,
    %c1_i32 = arith.constant 1 : i32
    %20 = arith.cmpi eq, %arg1, %c1_i32 : i32
    %21 = arith.extui %20 : i1 to i32
    %c0_i32_12 = arith.constant 0 : i32
    %22 = arith.cmpi ne, %21, %c0_i32_12 : i32
    scf.if %22 {
      %c0_13 = arith.constant 0 : index
      %c0_14 = arith.constant 0 : index
      %23 = vector.load %arg7[%c0_13, %c0_14] : memref<16x128xf32, #tpu.memory_space<vmem>>, vector<16x128xf32>
      %c0_15 = arith.constant 0 : index
      %c0_16 = arith.constant 0 : index
      %24 = vector.load %arg6[%c0_15, %c0_16] : memref<16x128xf32, #tpu.memory_space<vmem>>, vector<16x128xf32>
      tpu.vector_store %arg6[%c0_15, %c0_16], %23 {strides = array<i32>} : memref<16x128xf32, #tpu.memory_space<vmem>>, vector<16x128xf32>,
    } else {
    }
    return
  }
  func.func @transform_0(%arg0: i32, %arg1: i32) -> (i32, i32) {
    %c0_i32 = arith.constant 0 : i32
    %c0_i32_0 = arith.constant 0 : i32
    return %arg0, %c0_i32 : i32, i32
  }
  func.func @transform_1(%arg0: i32, %arg1: i32) -> (i32, i32) {
    %c0_i32 = arith.constant 0 : i32
    %c0_i32_0 = arith.constant 0 : i32
    return %arg0, %c0_i32 : i32, i32
  }
  func.func @transform_2(%arg0: i32, %arg1: i32) -> (i32, i32) {
    %c0_i32 = arith.constant 0 : i32
    %c0_i32_0 = arith.constant 0 : i32
    return %c0_i32, %arg1 : i32, i32
  }
  func.func @transform_3(%arg0: i32, %arg1: i32) -> (i32, i32) {
    %c0_i32 = arith.constant 0 : i32
    %c0_i32_0 = arith.constant 0 : i32
    return %arg1, %c0_i32 : i32, i32
  }
  func.func @transform_4(%arg0: i32, %arg1: i32) -> (i32, i32) {
    %c0_i32 = arith.constant 0 : i32
    %c0_i32_0 = arith.constant 0 : i32
    return %arg0, %c0_i32 : i32, i32
  }
}

</mosaic_0001>

<llo_original>
// kernel: tpu_custom_call.1
$region0: #{tpu_custom_call.1}
  #allocation0 [shape = 'u32[]', space=smem, size = 0x4, offset = 0x4, fixed_abs, tag = 'smem constant byte address 0x4 - core index']
  #allocation1 [shape = 'u32[144,128]{1,0:T(1,128)}', space=vmem, size = 0x12000, scoped, tag = 'internal scratch']
  #allocation2 [shape = 'f32[16,128]{1,0:T(8,128)}', space=vmem, size = 0x2000, scoped, tag = 'scratch operand']
  %s0 = inlined_call_operand.hbm [shape: f32[16,128], index: 0, kind: input, shape index: {}]
  %s1 = inlined_call_operand.hbm [shape: f32[16,128], index: 1, kind: input, shape index: {}]
  %s2 = inlined_call_operand.hbm [shape: f32[128,512], index: 2, kind: input, shape index: {}]
  %s3 = inlined_call_operand.hbm [shape: f32[256,128], index: 3, kind: input, shape index: {}]
  %s4 = inlined_call_operand.hbm [shape: f32[16,128], index: 4, kind: output, shape index: {}]
  %s5 = sld [smem:[#allocation0]]
  $region73: #{tpu_custom_call.1} parent=0
    _
  %s7 = ssub.s32 1, %s5
  %s8 = scalar_select 0, %s7, %s5
  $region1: #{tpu_custom_call.1} parent=0
    #allocation3 [shape = 'u8[8192]{0}', space=vmem, size = 0x2000, scoped, tag = 'input window, operand 0, single buffered']
    #allocation4 [shape = 's32[2]{0}', space=sflag, size = 0x8, scoped, tag = 'scoped memory for tpu_custom_call.1']
    #allocation5 [shape = 's32[2]{0}', space=sflag, size = 0x8, scoped, tag = 'scoped memory for tpu_custom_call.1']
    #allocation6 [shape = 'u8[8192]{0}', space=vmem, size = 0x2000, scoped, tag = 'input window, operand 1, single buffered']
    #allocation7 [shape = 's32[1]{0}', space=sflag, size = 0x4, scoped, tag = 'scoped memory for tpu_custom_call.1']
    #allocation8 [shape = 'u8[262144]{0}', space=vmem, size = 0x40000, scoped, tag = 'input window, operand 2']
    #allocation9 [shape = 'u8[131072]{0}', space=vmem, size = 0x20000, scoped, tag = 'input window, operand 3']
    #allocation10 [shape = 'u8[8192]{0}', space=vmem, size = 0x2000, scoped, tag = 'output window, operand 0, single buffered']
    %9 = vsyncpa [#allocation4], 0
    %10 = vsyncpa [#allocation7], 0
    %11 = vsyncpa [#allocation5], 0
    loop: start=0, step=1, limit=4
    $region2: #{tpu_custom_call.1} parent=1 // loop_pre_header
      _
    $region3: #{tpu_custom_call.1} parent=1 // loop_header
      %s13 = sphi 0, %s17
      %p14 = scmp.ge.s32.totalorder %s13, 4
      %s20 = sphi 0, %s32
      %s21 = sphi 0, %s28
      %s22 = sphi 0, %s20
      %s23 = sphi 0, %s21
      %s24 = sphi 0, %s22
      %s25 = sphi 0, %s23
      %s35 = sphi 0, %s37
      %s38 = sphi 0, %s35
      %s39 = sphi 0, %s38
      %s55 = sphi 0, %s39
      %s61 = sphi 0, %s63
      %s64 = sphi 0, %s61
      %s65 = sphi 0, %s64
      %s81 = sphi 0, %s65
      %s87 = sphi 0, %s89
      %s90 = sphi 0, %s87
      %s91 = sphi 0, %s90
      %s107 = sphi 0, %s91
      %s113 = sphi 0, %s115
      %s116 = sphi 0, %s113
      %s117 = sphi 0, %s116
      %s133 = sphi 0, %s117
      %s139 = sphi 0, %s141
      %s142 = sphi 0, %s139
      %s143 = sphi 0, %s142
      %s159 = sphi 0, %s143
    $region4: #{tpu_custom_call.1} parent=1 // loop_header_branch
      %16 = sbr.rel (%p14) target = $region8
    $region5: #{tpu_custom_call.1} parent=1 // loop_body
      %s18 = ssub.s32 %s13, 1
      %s19 = ssub.s32 %s13, 2
      %s26 = sadd.s32 1, %s21
      %p27 = scmp.ge.s32.totalorder %s26, 2
      %s28 = scalar_select %p27, 0, %s26
      %s29 = sadd.s32 1, %s20
      %s30 = scalar_select %p27, %s29, %s20
      %p31 = scmp.ge.s32.totalorder %s30, 1
      %s32 = scalar_select %p31, 0, %s30
      %s33 = ssub.s32 %s20, %s32
      %p34 = scmp.eq.s32.totalorder %s33, 0
      %s36 = sadd.s32 %s35, 1
      %s37 = scalar_select %p34, %s35, %s36
      %p40 = pneg %p34
      %p41 = scmp.eq.s32.totalorder %s13, 1
      %p42 = por %p40, %p41
      %p43 = scmp.ne.s32.totalorder %s35, %s38
      %p44 = scmp.eq.s32.totalorder %s13, 0
      %p45 = por %p43, %p44
      %p46 = scmp.ne.s32.totalorder %s35, %s38
      %p47 = scmp.eq.s32.totalorder %s18, 1
      %p48 = por %p46, %p47
      %p49 = scmp.ne.s32.totalorder %s38, %s39
      %p50 = scmp.eq.s32.totalorder %s18, 0
      %p51 = por %p49, %p50
      %p52 = scmp.ne.s32.totalorder %s38, %s39
      %p53 = scmp.eq.s32.totalorder %s19, 1
      %p54 = por %p52, %p53
      %p56 = scmp.ne.s32.totalorder %s39, %s55
      %p57 = scmp.eq.s32.totalorder %s19, 0
      %p58 = por %p56, %p57
      %s59 = ssub.s32 %s20, %s32
      %p60 = scmp.eq.s32.totalorder %s59, 0
      %s62 = sadd.s32 %s61, 1
      %s63 = scalar_select %p60, %s61, %s62
      %p66 = pneg %p60
      %p67 = scmp.eq.s32.totalorder %s13, 1
      %p68 = por %p66, %p67
      %p69 = scmp.ne.s32.totalorder %s61, %s64
      %p70 = scmp.eq.s32.totalorder %s13, 0
      %p71 = por %p69, %p70
      %p72 = scmp.ne.s32.totalorder %s61, %s64
      %p73 = scmp.eq.s32.totalorder %s18, 1
      %p74 = por %p72, %p73
      %p75 = scmp.ne.s32.totalorder %s64, %s65
      %p76 = scmp.eq.s32.totalorder %s18, 0
      %p77 = por %p75, %p76
      %p78 = scmp.ne.s32.totalorder %s64, %s65
      %p79 = scmp.eq.s32.totalorder %s19, 1
      %p80 = por %p78, %p79
      %p82 = scmp.ne.s32.totalorder %s65, %s81
      %p83 = scmp.eq.s32.totalorder %s19, 0
      %p84 = por %p82, %p83
      %s85 = ssub.s32 %s21, %s28
      %p86 = scmp.eq.s32.totalorder %s85, 0
      %s88 = sadd.s32 %s87, 1
      %s89 = scalar_select %p86, %s87, %s88
      %p92 = pneg %p86
      %p93 = scmp.eq.s32.totalorder %s13, 1
      %p94 = por %p92, %p93
      %p95 = scmp.ne.s32.totalorder %s87, %s90
      %p96 = scmp.eq.s32.totalorder %s13, 0
      %p97 = por %p95, %p96
      %p98 = scmp.ne.s32.totalorder %s87, %s90
      %p99 = scmp.eq.s32.totalorder %s18, 1
      %p100 = por %p98, %p99
      %p101 = scmp.ne.s32.totalorder %s90, %s91
      %p102 = scmp.eq.s32.totalorder %s18, 0
      %p103 = por %p101, %p102
      %p104 = scmp.ne.s32.totalorder %s90, %s91
      %p105 = scmp.eq.s32.totalorder %s19, 1
      %p106 = por %p104, %p105
      %p108 = scmp.ne.s32.totalorder %s91, %s107
      %p109 = scmp.eq.s32.totalorder %s19, 0
      %p110 = por %p108, %p109
      %s111 = ssub.s32 %s21, %s28
      %p112 = scmp.eq.s32.totalorder %s111, 0
      %s114 = sadd.s32 %s113, 1
      %s115 = scalar_select %p112, %s113, %s114
      %p118 = pneg %p112
      %p119 = scmp.eq.s32.totalorder %s13, 1
      %p120 = por %p118, %p119
      %p121 = scmp.ne.s32.totalorder %s113, %s116
      %p122 = scmp.eq.s32.totalorder %s13, 0
      %p123 = por %p121, %p122
      %p124 = scmp.ne.s32.totalorder %s113, %s116
      %p125 = scmp.eq.s32.totalorder %s18, 1
      %p126 = por %p124, %p125
      %p127 = scmp.ne.s32.totalorder %s116, %s117
      %p128 = scmp.eq.s32.totalorder %s18, 0
      %p129 = por %p127, %p128
      %p130 = scmp.ne.s32.totalorder %s116, %s117
      %p131 = scmp.eq.s32.totalorder %s19, 1
      %p132 = por %p130, %p131
      %p134 = scmp.ne.s32.totalorder %s117, %s133
      %p135 = scmp.eq.s32.totalorder %s19, 0
      %p136 = por %p134, %p135
      %s137 = ssub.s32 %s20, %s32
      %p138 = scmp.eq.s32.totalorder %s137, 0
      %s140 = sadd.s32 %s139, 1
      %s141 = scalar_select %p138, %s139, %s140
      %p144 = pneg %p138
      %p145 = scmp.eq.s32.totalorder %s13, 1
      %p146 = por %p144, %p145
      %p147 = scmp.ne.s32.totalorder %s139, %s142
      %p148 = scmp.eq.s32.totalorder %s13, 0
      %p149 = por %p147, %p148
      %p150 = scmp.ne.s32.totalorder %s139, %s142
      %p151 = scmp.eq.s32.totalorder %s18, 1
      %p152 = por %p150, %p151
      %p153 = scmp.ne.s32.totalorder %s142, %s143
      %p154 = scmp.eq.s32.totalorder %s18, 0
      %p155 = por %p153, %p154
      %p156 = scmp.ne.s32.totalorder %s142, %s143
      %p157 = scmp.eq.s32.totalorder %s19, 1
      %p158 = por %p156, %p157
      %p160 = scmp.ne.s32.totalorder %s143, %s159
      %p161 = scmp.eq.s32.totalorder %s19, 0
      %p162 = por %p160, %p161
      %p163 = scmp.le.s32.totalorder 1, %s13
      %p164 = scmp.lt.s32.totalorder %s13, 3
      %p165 = pnand %p163, %p164
      %p166 = pneg %p165
      // Predicated region
      $region9: #{tpu_custom_call.1} parent=5 // pred_check
        _
      $region10: #{tpu_custom_call.1} parent=5 // pred_check_branch
        %168 = sbr.rel (%p165) target = $region12
      $region11: #{tpu_custom_call.1} parent=5 // pred_region
        %s169 = ssub.s32 %s13, 1
        // Predicated region
        $region13: #{tpu_custom_call.1} parent=11 // pred_check
          %p170 = pneg %p51
        $region14: #{tpu_custom_call.1} parent=11 // pred_check_branch
          %172 = sbr.rel (%p170) target = $region16
        $region15: #{tpu_custom_call.1} parent=11 // pred_region
          %s173 = smul.u32 2, %s22
          %s175 = ssub.s32 256, 256
          %176 = vsyncadd [#allocation4], %s175
          %s177 = smul.addr %s173, 128
          %s178 = scalar_lea.hbm %s0, %s177
          %s179 = sshll.u32 [#allocation3], 4
          %s180 = int_to_ptr.vmem [resolvable:$true] %s179
          %185 = dma.hbm_to_vmem [thread:$0]  %s178, 256, %s180, [#allocation4], 128, 128, 8
        $region16: #{tpu_custom_call.1} parent=11 // pred_fallthru
          _
        // Predicated region
        $region17: #{tpu_custom_call.1} parent=11 // pred_check
          %p186 = pneg %p77
        $region18: #{tpu_custom_call.1} parent=11 // pred_check_branch
          %188 = sbr.rel (%p186) target = $region20
        $region19: #{tpu_custom_call.1} parent=11 // pred_region
          %s189 = smul.u32 2, %s22
          %s191 = ssub.s32 256, 256
          %192 = vsyncadd [#allocation7], %s191
          %s193 = smul.addr %s189, 128
          %s194 = scalar_lea.hbm %s1, %s193
          %s195 = sshll.u32 [#allocation6], 4
          %s196 = int_to_ptr.vmem [resolvable:$true] %s195
          %201 = dma.hbm_to_vmem [thread:$0]  %s194, 256, %s196, [#allocation7], 128, 128, 8
        $region20: #{tpu_custom_call.1} parent=11 // pred_fallthru
          _
      $region12: #{tpu_custom_call.1} parent=5 // pred_fallthru
        _
      %p202 = scmp.lt.s32.totalorder %s13, 2
      // Predicated region
      $region21: #{tpu_custom_call.1} parent=5 // pred_check
        %p203 = pneg %p202
      $region22: #{tpu_custom_call.1} parent=5 // pred_check_branch
        %205 = sbr.rel (%p203) target = $region24
      $region23: #{tpu_custom_call.1} parent=5 // pred_region
        // Predicated region
        $region25: #{tpu_custom_call.1} parent=23 // pred_check
          %p206 = pneg %p97
        $region26: #{tpu_custom_call.1} parent=23 // pred_check_branch
          %208 = sbr.rel (%p206) target = $region28
        $region27: #{tpu_custom_call.1} parent=23 // pred_region
          %s209 = sand.u32 %s13, 1
          %s210 = scalar_lea.sflag [#allocation4], %s209
          %s211 = sand.u32 %s87, 1
          %s212 = smul.addr %s211, 256
          %s213 = scalar_lea.vmem [#allocation8], %s212
          %s214 = smul.u32 2, %s21
          %s216 = ssub.s32 4096, 4096
          %217 = vsyncadd %s210, %s216
          %s218 = smul.addr %s214, 128
          %s219 = scalar_lea.hbm %s2, %s218
          %s220 = sshll.u32 %s213, 4
          %s221 = int_to_ptr.vmem [resolvable:$true] %s220
          %226 = dma.hbm_to_vmem [thread:$0]  %s219, 4096, %s221, %s210, 512, 256, 16
        $region28: #{tpu_custom_call.1} parent=23 // pred_fallthru
          _
        // Predicated region
        $region29: #{tpu_custom_call.1} parent=23 // pred_check
          %p227 = pneg %p123
        $region30: #{tpu_custom_call.1} parent=23 // pred_check_branch
          %229 = sbr.rel (%p227) target = $region32
        $region31: #{tpu_custom_call.1} parent=23 // pred_region
          %s230 = sand.u32 %s13, 1
          %s231 = scalar_lea.sflag [#allocation4], %s230
          %s232 = sand.u32 %s113, 1
          %s233 = smul.addr %s232, 128
          %s234 = scalar_lea.vmem [#allocation9], %s233
          %s235 = smul.u32 16, %s21
          %s237 = ssub.s32 2048, 2048
          %238 = vsyncadd %s231, %s237
          %s239 = smul.addr %s235, 128
          %s240 = scalar_lea.hbm %s3, %s239
          %s241 = sshll.u32 %s234, 4
          %s242 = int_to_ptr.vmem [resolvable:$true] %s241
          %247 = dma.hbm_to_vmem [thread:$0]  %s240, 2048, %s242, %s231, 128, 128, 8
        $region32: #{tpu_custom_call.1} parent=23 // pred_fallthru
          _
      $region24: #{tpu_custom_call.1} parent=5 // pred_fallthru
        _
      %p248 = scmp.le.s32.totalorder 1, %s13
      %p249 = scmp.lt.s32.totalorder %s13, 3
      %p250 = pnand %p248, %p249
      %p251 = pneg %p250
      // Predicated region
      $region33: #{tpu_custom_call.1} parent=5 // pred_check
        _
      $region34: #{tpu_custom_call.1} parent=5 // pred_check_branch
        %253 = sbr.rel (%p250) target = $region36
      $region35: #{tpu_custom_call.1} parent=5 // pred_region
        %s254 = ssub.s32 %s13, 1
        // Predicated region
        $region37: #{tpu_custom_call.1} parent=35 // pred_check
          %p255 = pneg %p51
        $region38: #{tpu_custom_call.1} parent=35 // pred_check_branch
          %257 = sbr.rel (%p255) target = $region40
        $region39: #{tpu_custom_call.1} parent=35 // pred_region
          %258 = dma.done [#allocation4], 256
        $region40: #{tpu_custom_call.1} parent=35 // pred_fallthru
          _
        // Predicated region
        $region41: #{tpu_custom_call.1} parent=35 // pred_check
          %p259 = pneg %p77
        $region42: #{tpu_custom_call.1} parent=35 // pred_check_branch
          %261 = sbr.rel (%p259) target = $region44
        $region43: #{tpu_custom_call.1} parent=35 // pred_region
          %262 = dma.done [#allocation7], 256
        $region44: #{tpu_custom_call.1} parent=35 // pred_fallthru
          _
        %s263 = sand.u32 %s18, 1
        %s264 = scalar_lea.sflag [#allocation4], %s263
        %s265 = sand.u32 %s90, 1
        %s266 = smul.addr %s265, 256
        %s267 = scalar_lea.vmem [#allocation8], %s266
        // Predicated region
        $region45: #{tpu_custom_call.1} parent=35 // pred_check
          %p268 = pneg %p103
        $region46: #{tpu_custom_call.1} parent=35 // pred_check_branch
          %270 = sbr.rel (%p268) target = $region48
        $region47: #{tpu_custom_call.1} parent=35 // pred_region
          %271 = dma.done %s264, 4096
        $region48: #{tpu_custom_call.1} parent=35 // pred_fallthru
          _
        %s272 = sand.u32 %s18, 1
        %s273 = scalar_lea.sflag [#allocation4], %s272
        %s274 = sand.u32 %s116, 1
        %s275 = smul.addr %s274, 128
        %s276 = scalar_lea.vmem [#allocation9], %s275
        // Predicated region
        $region49: #{tpu_custom_call.1} parent=35 // pred_check
          %p277 = pneg %p129
        $region50: #{tpu_custom_call.1} parent=35 // pred_check_branch
          %279 = sbr.rel (%p277) target = $region52
        $region51: #{tpu_custom_call.1} parent=35 // pred_region
          %280 = dma.done %s273, 2048
        $region52: #{tpu_custom_call.1} parent=35 // pred_fallthru
          _
        %p281 = pneg %p51
        %p282 = pneg %p48
        %p283 = pneg %p77
        %p284 = pneg %p74
        %s285 = sand.u32 %s18, 1
        %s286 = scalar_lea.sflag [#allocation4], %s285
        %s287 = sand.u32 %s90, 1
        %s288 = smul.addr %s287, 256
        %s289 = scalar_lea.vmem [#allocation8], %s288
        %p290 = pneg %p103
        %p291 = pneg %p100
        %s292 = sand.u32 %s18, 1
        %s293 = scalar_lea.sflag [#allocation4], %s292
        %s294 = sand.u32 %s116, 1
        %s295 = smul.addr %s294, 128
        %s296 = scalar_lea.vmem [#allocation9], %s295
        %p297 = pneg %p129
        %p298 = pneg %p126
        %p299 = pneg %p155
        %p300 = pneg %p152
        %s301 = smul.u32 2, %s22
        %s302 = smul.u32 2, %s22
        %s303 = smul.u32 2, %s23
        %s304 = smul.u32 16, %s23
        %s305 = smul.u32 2, %s22
        %p306 = scmp.eq.s32.totalorder %s23, 0
        // Predicated region
        $region53: #{tpu_custom_call.1} parent=35 // pred_check
          %p307 = pneg %p306
        $region54: #{tpu_custom_call.1} parent=35 // pred_check_branch
          %309 = sbr.rel (%p307) target = $region56
        $region55: #{tpu_custom_call.1} parent=35 // pred_region
          %v310 = vld [vmem:[#allocation6] sm:$0xff]
          %v311 = vld [vmem:[#allocation6 + $0x8] sm:$0xff]
          %312 = vst [vmem:[#allocation2] sm:$0xff] %v310
          %313 = vst [vmem:[#allocation2 + $0x8] sm:$0xff] %v311
        $region56: #{tpu_custom_call.1} parent=35 // pred_fallthru
          _
        %v314 = vld [vmem:[#allocation3] sm:$0xff]
        %v315 = vld [vmem:[#allocation3 + $0x8] sm:$0xff]
        %v316 = vld [vmem:[%s267] sm:$0xff]
        %v317 = vld [vmem:[%s267 + $0x8] sm:$0xff]
        %v318 = vld [vmem:[%s267 + $0x10] sm:$0xff]
        %v319 = vld [vmem:[%s267 + $0x18] sm:$0xff]
        %v320 = vld [vmem:[%s267 + $0x20] sm:$0xff]
        %v321 = vld [vmem:[%s267 + $0x28] sm:$0xff]
        %v322 = vld [vmem:[%s267 + $0x30] sm:$0xff]
        %v323 = vld [vmem:[%s267 + $0x38] sm:$0xff]
        %v324 = vld [vmem:[%s267 + $0x40] sm:$0xff]
        %v325 = vld [vmem:[%s267 + $0x48] sm:$0xff]
        %v326 = vld [vmem:[%s267 + $0x50] sm:$0xff]
        %v327 = vld [vmem:[%s267 + $0x58] sm:$0xff]
        %v328 = vld [vmem:[%s267 + $0x60] sm:$0xff]
        %v329 = vld [vmem:[%s267 + $0x68] sm:$0xff]
        %v330 = vld [vmem:[%s267 + $0x70] sm:$0xff]
        %v331 = vld [vmem:[%s267 + $0x78] sm:$0xff]
        %v332 = vld [vmem:[%s267 + $0x80] sm:$0xff]
        %v333 = vld [vmem:[%s267 + $0x88] sm:$0xff]
        %v334 = vld [vmem:[%s267 + $0x90] sm:$0xff]
        %v335 = vld [vmem:[%s267 + $0x98] sm:$0xff]
        %v336 = vld [vmem:[%s267 + $0xa0] sm:$0xff]
        %v337 = vld [vmem:[%s267 + $0xa8] sm:$0xff]
        %v338 = vld [vmem:[%s267 + $0xb0] sm:$0xff]
        %v339 = vld [vmem:[%s267 + $0xb8] sm:$0xff]
        %v340 = vld [vmem:[%s267 + $0xc0] sm:$0xff]
        %v341 = vld [vmem:[%s267 + $0xc8] sm:$0xff]
        %v342 = vld [vmem:[%s267 + $0xd0] sm:$0xff]
        %v343 = vld [vmem:[%s267 + $0xd8] sm:$0xff]
        %v344 = vld [vmem:[%s267 + $0xe0] sm:$0xff]
        %v345 = vld [vmem:[%s267 + $0xe8] sm:$0xff]
        %v346 = vld [vmem:[%s267 + $0xf0] sm:$0xff]
        %v347 = vld [vmem:[%s267 + $0xf8] sm:$0xff]
        %348 = vmatprep.subr.mxu0 %v347
        %349 = vmatpush1.msra.mxu0 %v346
        %350 = vmatprep.subr.mxu0 %v345
        %351 = vmatpush1.msra.mxu0 %v344
        %352 = vmatprep.subr.mxu0 %v343
        %353 = vmatpush1.msra.mxu0 %v342
        %354 = vmatprep.subr.mxu0 %v341
        %355 = vmatpush1.msra.mxu0 %v340
        %356 = vmatprep.subr.mxu0 %v339
        %357 = vmatpush1.msra.mxu0 %v338
        %358 = vmatprep.subr.mxu0 %v337
        %359 = vmatpush1.msra.mxu0 %v336
        %360 = vmatprep.subr.mxu0 %v335
        %361 = vmatpush1.msra.mxu0 %v334
        %362 = vmatprep.subr.mxu0 %v333
        %363 = vmatpush1.msra.mxu0 %v332
        %364 = vmatprep.subr.mxu0 %v331
        %365 = vmatpush1.msra.mxu0 %v330
        %366 = vmatprep.subr.mxu0 %v329
        %367 = vmatpush1.msra.mxu0 %v328
        %368 = vmatprep.subr.mxu0 %v327
        %369 = vmatpush1.msra.mxu0 %v326
        %370 = vmatprep.subr.mxu0 %v325
        %371 = vmatpush1.msra.mxu0 %v324
        %372 = vmatprep.subr.mxu0 %v323
        %373 = vmatpush1.msra.mxu0 %v322
        %374 = vmatprep.subr.mxu0 %v321
        %375 = vmatpush1.msra.mxu0 %v320
        %376 = vmatprep.subr.mxu0 %v319
        %377 = vmatpush1.msra.mxu0 %v318
        %378 = vmatprep.subr.mxu0 %v317
        %379 = vmatpush1.msra.mxu0 %v316
        %380 = vmatprep.subr.mxu0 0.0
        %381 = vmatpush2.msra.mxu0 0.0
        %382 = vmatprep.subr.mxu0 0.0
        %383 = vmatpush2.msra.mxu0 0.0
        %384 = vmatprep.subr.mxu0 0.0
        %385 = vmatpush2.msra.mxu0 0.0
        %386 = vmatprep.subr.mxu0 0.0
        %387 = vmatpush2.msra.mxu0 0.0
        %388 = vmatprep.subr.mxu0 0.0
        %389 = vmatpush2.msra.mxu0 0.0
        %390 = vmatprep.subr.mxu0 0.0
        %391 = vmatpush2.msra.mxu0 0.0
        %392 = vmatprep.subr.mxu0 0.0
        %393 = vmatpush2.msra.mxu0 0.0
        %394 = vmatprep.subr.mxu0 0.0
        %395 = vmatpush2.msra.mxu0 0.0
        %396 = vmatprep.subr.mxu0 0.0
        %397 = vmatpush2.msra.mxu0 0.0
        %398 = vmatprep.subr.mxu0 0.0
        %399 = vmatpush2.msra.mxu0 0.0
        %400 = vmatprep.subr.mxu0 0.0
        %401 = vmatpush2.msra.mxu0 0.0
        %402 = vmatprep.subr.mxu0 0.0
        %403 = vmatpush2.msra.mxu0 0.0
        %404 = vmatprep.subr.mxu0 0.0
        %405 = vmatpush2.msra.mxu0 0.0
        %406 = vmatprep.subr.mxu0 0.0
        %407 = vmatpush2.msra.mxu0 0.0
        %408 = vmatprep.subr.mxu0 0.0
        %409 = vmatpush2.msra.mxu0 0.0
        %410 = vmatprep.subr.mxu0 0.0
        %411 = vmatpush2.msra.mxu0 0.0
        %412 = vmatprep.mubr.f32.mxu0 0.0
        %413 = vmatmul.mubr.f32.gmra.mxu0 %v314
        %v414 = vpop.f32.mrf.mxu0
        %v415 = vadd.f32 0.0, %v414
        %v416 = vpop.f32.mrf.mxu0
        %v417 = vadd.f32 0.0, %v416
        %418 = vmatprep.mubr.f32.mxu0 0.0
        %419 = vmatmul.mubr.f32.gmra.mxu0 %v315
        %v420 = vpop.f32.mrf.mxu0
        %v421 = vadd.f32 0.0, %v420
        %v422 = vpop.f32.mrf.mxu0
        %v423 = vadd.f32 0.0, %v422
        %424 = vdwg.mxu0
        %v425 = vxor.u32 %v415, 2147483648
        %v426 = vxor.u32 %v421, 2147483648
        %v427 = vmul.f32 %v425, 1.442695
        %v428 = vpow.pop %v427
        %v429 = vmul.f32 %v426, 1.442695
        %v430 = vpow.pop %v429
        %v431 = vadd.f32 %v428, 1.0
        %v432 = vadd.f32 %v430, 1.0
        %v433 = vrcp.pop %v431
        %v434 = vmul.f32 1.0, %v433
        %v435 = vrcp.pop %v432
        %v436 = vmul.f32 1.0, %v435
        %v437 = vmul.f32 %v415, %v434
        %v438 = vmul.f32 %v421, %v436
        %v439 = vmul.f32 %v437, %v417
        %v440 = vmul.f32 %v438, %v423
        %v441 = vld [vmem:[#allocation2] sm:$0xff]
        %v442 = vld [vmem:[#allocation2 + $0x8] sm:$0xff]
        %v443 = vld [vmem:[%s276] sm:$0xff]
        %v444 = vld [vmem:[%s276 + $0x8] sm:$0xff]
        %v445 = vld [vmem:[%s276 + $0x10] sm:$0xff]
        %v446 = vld [vmem:[%s276 + $0x18] sm:$0xff]
        %v447 = vld [vmem:[%s276 + $0x20] sm:$0xff]
        %v448 = vld [vmem:[%s276 + $0x28] sm:$0xff]
        %v449 = vld [vmem:[%s276 + $0x30] sm:$0xff]
        %v450 = vld [vmem:[%s276 + $0x38] sm:$0xff]
        %v451 = vld [vmem:[%s276 + $0x40] sm:$0xff]
        %v452 = vld [vmem:[%s276 + $0x48] sm:$0xff]
        %v453 = vld [vmem:[%s276 + $0x50] sm:$0xff]
        %v454 = vld [vmem:[%s276 + $0x58] sm:$0xff]
        %v455 = vld [vmem:[%s276 + $0x60] sm:$0xff]
        %v456 = vld [vmem:[%s276 + $0x68] sm:$0xff]
        %v457 = vld [vmem:[%s276 + $0x70] sm:$0xff]
        %v458 = vld [vmem:[%s276 + $0x78] sm:$0xff]
        %459 = vmatprep.subr.mxu0 0.0
        %460 = vmatpush1.msra.mxu0 %v458
        %461 = vmatprep.subr.mxu0 0.0
        %462 = vmatpush1.msra.mxu0 %v457
        %463 = vmatprep.subr.mxu0 0.0
        %464 = vmatpush1.msra.mxu0 %v456
        %465 = vmatprep.subr.mxu0 0.0
        %466 = vmatpush1.msra.mxu0 %v455
        %467 = vmatprep.subr.mxu0 0.0
        %468 = vmatpush1.msra.mxu0 %v454
        %469 = vmatprep.subr.mxu0 0.0
        %470 = vmatpush1.msra.mxu0 %v453
        %471 = vmatprep.subr.mxu0 0.0
        %472 = vmatpush1.msra.mxu0 %v452
        %473 = vmatprep.subr.mxu0 0.0
        %474 = vmatpush1.msra.mxu0 %v451
        %475 = vmatprep.subr.mxu0 0.0
        %476 = vmatpush1.msra.mxu0 %v450
        %477 = vmatprep.subr.mxu0 0.0
        %478 = vmatpush1.msra.mxu0 %v449
        %479 = vmatprep.subr.mxu0 0.0
        %480 = vmatpush1.msra.mxu0 %v448
        %481 = vmatprep.subr.mxu0 0.0
        %482 = vmatpush1.msra.mxu0 %v447
        %483 = vmatprep.subr.mxu0 0.0
        %484 = vmatpush1.msra.mxu0 %v446
        %485 = vmatprep.subr.mxu0 0.0
        %486 = vmatpush1.msra.mxu0 %v445
        %487 = vmatprep.subr.mxu0 0.0
        %488 = vmatpush1.msra.mxu0 %v444
        %489 = vmatprep.subr.mxu0 0.0
        %490 = vmatpush1.msra.mxu0 %v443
        %491 = vmatprep.subr.mxu0 0.0
        %492 = vmatpush2.msra.mxu0 0.0
        %493 = vmatprep.subr.mxu0 0.0
        %494 = vmatpush2.msra.mxu0 0.0
        %495 = vmatprep.subr.mxu0 0.0
        %496 = vmatpush2.msra.mxu0 0.0
        %497 = vmatprep.subr.mxu0 0.0
        %498 = vmatpush2.msra.mxu0 0.0
        %499 = vmatprep.subr.mxu0 0.0
        %500 = vmatpush2.msra.mxu0 0.0
        %501 = vmatprep.subr.mxu0 0.0
        %502 = vmatpush2.msra.mxu0 0.0
        %503 = vmatprep.subr.mxu0 0.0
        %504 = vmatpush2.msra.mxu0 0.0
        %505 = vmatprep.subr.mxu0 0.0
        %506 = vmatpush2.msra.mxu0 0.0
        %507 = vmatprep.subr.mxu0 0.0
        %508 = vmatpush2.msra.mxu0 0.0
        %509 = vmatprep.subr.mxu0 0.0
        %510 = vmatpush2.msra.mxu0 0.0
        %511 = vmatprep.subr.mxu0 0.0
        %512 = vmatpush2.msra.mxu0 0.0
        %513 = vmatprep.subr.mxu0 0.0
        %514 = vmatpush2.msra.mxu0 0.0
        %515 = vmatprep.subr.mxu0 0.0
        %516 = vmatpush2.msra.mxu0 0.0
        %517 = vmatprep.subr.mxu0 0.0
        %518 = vmatpush2.msra.mxu0 0.0
        %519 = vmatprep.subr.mxu0 0.0
        %520 = vmatpush2.msra.mxu0 0.0
        %521 = vmatprep.subr.mxu0 0.0
        %522 = vmatpush2.msra.mxu0 0.0
        %523 = vmatprep.mubr.f32.mxu0 0.0
        %524 = vmatmul.mubr.f32.gmra.mxu0 %v439
        %v525 = vpop.f32.mrf.mxu0
        %v526 = vadd.f32 0.0, %v525
        %v527 = vpop.f32.mrf.mxu0
        %528 = vmatprep.mubr.f32.mxu0 0.0
        %529 = vmatmul.mubr.f32.gmra.mxu0 %v440
        %v530 = vpop.f32.mrf.mxu0
        %v531 = vadd.f32 0.0, %v530
        %v532 = vpop.f32.mrf.mxu0
        %533 = vdwg.mxu0
        %v534 = vadd.f32 %v441, %v526
        %v535 = vadd.f32 %v442, %v531
        %536 = vst [vmem:[#allocation2] sm:$0xff] %v534
        %537 = vst [vmem:[#allocation2 + $0x8] sm:$0xff] %v535
        %p538 = scmp.eq.s32.totalorder %s23, 1
        // Predicated region
        $region57: #{tpu_custom_call.1} parent=35 // pred_check
          %p539 = pneg %p538
        $region58: #{tpu_custom_call.1} parent=35 // pred_check_branch
          %541 = sbr.rel (%p539) target = $region60
        $region59: #{tpu_custom_call.1} parent=35 // pred_region
          %v542 = vld [vmem:[#allocation2] sm:$0xff]
          %v543 = vld [vmem:[#allocation2 + $0x8] sm:$0xff]
          %544 = vst [vmem:[#allocation10] sm:$0xff] %v542
          %545 = vst [vmem:[#allocation10 + $0x8] sm:$0xff] %v543
        $region60: #{tpu_custom_call.1} parent=35 // pred_fallthru
          _
        // Predicated region
        $region61: #{tpu_custom_call.1} parent=35 // pred_check
          %p546 = pneg %p152
        $region62: #{tpu_custom_call.1} parent=35 // pred_check_branch
          %548 = sbr.rel (%p546) target = $region64
        $region63: #{tpu_custom_call.1} parent=35 // pred_region
          %s549 = smul.u32 2, %s22
          %s551 = ssub.s32 256, 256
          %552 = vsyncadd [#allocation5], %s551
          %s553 = smul.addr %s549, 128
          %s554 = scalar_lea.hbm %s4, %s553
          %s555 = sshll.u32 [#allocation10], 4
          %s556 = int_to_ptr.vmem [resolvable:$true] %s555
          %561 = dma.vmem_to_hbm [thread:$0]  %s556, 256, %s554, [#allocation5], 128, 128, 8
        $region64: #{tpu_custom_call.1} parent=35 // pred_fallthru
          _
        // Predicated region
        $region65: #{tpu_custom_call.1} parent=35 // pred_check
          %p562 = pneg %p152
        $region66: #{tpu_custom_call.1} parent=35 // pred_check_branch
          %564 = sbr.rel (%p562) target = $region68
        $region67: #{tpu_custom_call.1} parent=35 // pred_region
          %565 = dma.done [#allocation5], 256
        $region68: #{tpu_custom_call.1} parent=35 // pred_fallthru
          _
      $region36: #{tpu_custom_call.1} parent=5 // pred_fallthru
        _
      %p566 = scmp.le.s32.totalorder 2, %s13
      // Predicated region
      $region69: #{tpu_custom_call.1} parent=5 // pred_check
        %p567 = pneg %p566
      $region70: #{tpu_custom_call.1} parent=5 // pred_check_branch
        %569 = sbr.rel (%p567) target = $region72
      $region71: #{tpu_custom_call.1} parent=5 // pred_region
        %s570 = ssub.s32 %s13, 2
      $region72: #{tpu_custom_call.1} parent=5 // pred_fallthru
        _
    $region6: #{tpu_custom_call.1} parent=1 // loop_footer
      %s17 = sadd.s32 1, %s13
    $region7: #{tpu_custom_call.1} parent=1 // loop_footer_branch
      %12 = sbr.rel target = $region3
    $region8: #{tpu_custom_call.1} parent=1 // loop_exit
      _
    %571 = vsyncpa [#allocation4], 1
    %s572 = scalar_lea.sflag [#allocation4], 1
    %573 = vsyncpa %s572, 1
    %574 = vsyncpa [#allocation7], 1
    %575 = vsyncpa [#allocation5], 1
    %s576 = scalar_lea.sflag [#allocation5], 1
    %577 = vsyncpa %s576, 1

</llo_original>
